<compile_context>
chip_gen: v7x
topology: tpu7x:2x2x1
jax: 0.10.0
libtpu: 0.0.40
codegen_flags: <defaults>
</compile_context>

<pallas_src>
import functools

import jax
import jax.numpy as jnp
from jax import lax
from jax.experimental import pallas as pl
from jax.experimental.pallas import tpu as pltpu

OUT_SIZE = 9
INPUT_SIZE = 26


def _lstm_last_step_kernel(
    x_ref,        # (chunk*B, I)  time-major flattened input chunk (rows = t*B + b)
    w_ih_ref,     # (I, 4H)       fused input->gate weights, gate order i,f,g,o along columns
    w_hh_ref,     # (H, 4H)       fused hidden->gate weights
    b_ref,        # (1, 4H)       combined bias (b_ih + b_hh)
    w_out_ref,    # (H, 9)        final Linear weight (transposed)
    b_out_ref,    # (1, 9)        final Linear bias
    out_ref,      # (B, 9)        output (written at last grid step only)
    h_scratch,    # (B, H)        hidden state, persists across grid steps
    c_scratch,    # (B, H)        cell state, persists across grid steps
    *,
    chunk: int,
    batch: int,
    hidden: int,
):
    t_idx = pl.program_id(0)

    @pl.when(t_idx == 0)
    def _init():
        h_scratch[...] = jnp.zeros_like(h_scratch)
        c_scratch[...] = jnp.zeros_like(c_scratch)

    # ---- Batched input projection for the whole chunk: one lane-dense GEMM.
    # Bias folded in here so the recurrence adds no broadcasts.
    g_all = (
        jnp.dot(x_ref[...], w_ih_ref[...], preferred_element_type=jnp.float32)
        + b_ref[...]
    )  # (chunk*B, 4H), f32

    w_hh = w_hh_ref[...]
    h = h_scratch[...]          # f32 (B, H)
    c = c_scratch[...]          # f32 (B, H)
    H = hidden

    # ---- Serial recurrence: fully unrolled, state kept in vregs.
    for s in range(chunk):
        g_in = g_all[s * batch:(s + 1) * batch, :]                       # (B, 4H)
        pre = g_in + jnp.dot(
            h.astype(w_hh.dtype), w_hh, preferred_element_type=jnp.float32
        )                                                                # (B, 4H)
        i_g = jax.nn.sigmoid(pre[:, 0 * H:1 * H])
        f_g = jax.nn.sigmoid(pre[:, 1 * H:2 * H])
        g_g = jnp.tanh(pre[:, 2 * H:3 * H])
        o_g = jax.nn.sigmoid(pre[:, 3 * H:4 * H])
        c = f_g * c + i_g * g_g
        h = o_g * jnp.tanh(c)

    h_scratch[...] = h
    c_scratch[...] = c

    # ---- Linear head on the last hidden state, only at the final grid step.
    @pl.when(t_idx == pl.num_programs(0) - 1)
    def _final():
        out_ref[...] = (
            jnp.dot(h, w_out_ref[...], preferred_element_type=jnp.float32)
            + b_out_ref[...]
        ).astype(out_ref.dtype)


def _choose_chunk(T, B, max_rows=512):
    """Largest divisor c of T with (c*B) % 8 == 0 and c*B <= max_rows, else T."""
    best = None
    for c in range(1, T + 1):
        if T % c == 0 and (c * B) % 8 == 0 and c * B <= max_rows:
            best = c
    return best if best is not None else T


def rnn_forward(x, params, *, chunk=None):
    """x: (B, T, 26) float32, batch-first (PyTorch convention). Returns (B, 9) float32."""
    B, T, I = x.shape
    H, G4 = params["w_hh"].shape      # (H, 4H)
    compute_dtype = params["w_ih"].dtype

    if chunk is None:
        chunk = _choose_chunk(T, B)
    assert T % chunk == 0, "chunk must divide T"
    assert (chunk * B) % 8 == 0 or chunk == T, "chunk*B must be a multiple of 8 (or chunk == T)"
    n_chunks = T // chunk

    # Time-major flatten: row index = t*B + b. Cast to the matmul compute dtype.
    x_tm = jnp.transpose(x, (1, 0, 2)).reshape(T * B, I).astype(compute_dtype)

    kernel = functools.partial(
        _lstm_last_step_kernel, chunk=chunk, batch=B, hidden=H
    )

    out = pl.pallas_call(
        kernel,
        out_shape=jax.ShapeDtypeStruct((B, OUT_SIZE), jnp.float32),
        grid_spec=pltpu.PrefetchScalarGridSpec(
            num_scalar_prefetch=0,
            grid=(n_chunks,),
            in_specs=[
                pl.BlockSpec((chunk * B, I), lambda t: (t, 0)),   # x: streamed over time
                pl.BlockSpec((I, G4), lambda t: (0, 0)),          # W_ih: resident
                pl.BlockSpec((H, G4), lambda t: (0, 0)),          # W_hh: resident
                pl.BlockSpec((1, G4), lambda t: (0, 0)),          # bias: resident
                pl.BlockSpec((H, OUT_SIZE), lambda t: (0, 0)),    # W_out: resident
                pl.BlockSpec((1, OUT_SIZE), lambda t: (0, 0)),    # b_out: resident
            ],
            out_specs=pl.BlockSpec((B, OUT_SIZE), lambda t: (0, 0)),
            scratch_shapes=[
                pltpu.VMEM((B, H), jnp.float32),  # h (persists across grid steps)
                pltpu.VMEM((B, H), jnp.float32),  # c (persists across grid steps)
            ],
        ),
        compiler_params=pltpu.CompilerParams(
            dimension_semantics=("arbitrary",),   # recurrence over time: sequential
        ),
    )(
        x_tm,
        params["w_ih"],
        params["w_hh"],
        params["b"],
        params["w_out"],
        params["b_out"],
    )
    return out


def init_params(key, hidden_size, input_size=INPUT_SIZE, out_size=OUT_SIZE,
                compute_dtype=jnp.float32):
    """Deterministic parameter init (uniform, PyTorch-like scale), fused-gate layout."""
    H, I = hidden_size, input_size
    k = 1.0 / jnp.sqrt(jnp.float32(H))
    keys = jax.random.split(key, 6)
    # PyTorch layout: weight_ih_l0 (4H, I), weight_hh_l0 (4H, H), biases (4H,); gate order i,f,g,o.
    w_ih_pt = jax.random.uniform(keys[0], (4 * H, I), jnp.float32, -k, k)
    w_hh_pt = jax.random.uniform(keys[1], (4 * H, H), jnp.float32, -k, k)
    b_ih_pt = jax.random.uniform(keys[2], (4 * H,), jnp.float32, -k, k)
    b_hh_pt = jax.random.uniform(keys[3], (4 * H,), jnp.float32, -k, k)
    w_out_pt = jax.random.uniform(keys[4], (out_size, H), jnp.float32, -k, k)
    b_out_pt = jax.random.uniform(keys[5], (out_size,), jnp.float32, -k, k)

    # Fused repack: x @ W_ih_fused gives (B, 4H) with columns [i | f | g | o].
    w_ih = w_ih_pt.T.astype(compute_dtype)                  # (I, 4H)
    w_hh = w_hh_pt.T.astype(compute_dtype)                  # (H, 4H)
    b = (b_ih_pt + b_hh_pt).reshape(1, 4 * H)               # (1, 4H) f32
    w_out = w_out_pt.T                                      # (H, 9)  f32
    b_out = b_out_pt.reshape(1, out_size)                   # (1, 9)  f32

    return {"w_ih": w_ih, "w_hh": w_hh, "b": b, "w_out": w_out, "b_out": b_out}


def _reference_forward(x, params):
    """Pure-JAX LSTM reference (f32) for correctness checking."""
    B, T, I = x.shape
    H = params["w_hh"].shape[0]
    w_ih = params["w_ih"].astype(jnp.float32)
    w_hh = params["w_hh"].astype(jnp.float32)
    b = params["b"]

    def step(carry, x_t):
        h, c = carry
        pre = x_t @ w_ih + h @ w_hh + b
        i = jax.nn.sigmoid(pre[:, 0 * H:1 * H])
        f = jax.nn.sigmoid(pre[:, 1 * H:2 * H])
        g = jnp.tanh(pre[:, 2 * H:3 * H])
        o = jax.nn.sigmoid(pre[:, 3 * H:4 * H])
        c_new = f * c + i * g
        h_new = o * jnp.tanh(c_new)
        return (h_new, c_new), None

    h0 = jnp.zeros((B, H), jnp.float32)
    c0 = jnp.zeros((B, H), jnp.float32)
    (h_last, _), _ = lax.scan(step, (h0, c0), jnp.transpose(x, (1, 0, 2)))
    return h_last @ params["w_out"] + params["b_out"]


if __name__ == "__main__":
    B, T, I, H = 2, 8, INPUT_SIZE, 32

    key = jax.random.PRNGKey(0)
    k_x, k_p = jax.random.split(key)
    x = jax.random.normal(k_x, (B, T, I), dtype=jnp.float32)
    params = init_params(k_p, H, input_size=I, out_size=OUT_SIZE)

    ref = _reference_forward(x, params)

    # f32 path; chunk=4 -> grid of 2 time-chunks, exercising the streamed pipeline.
    out = rnn_forward(x, params, chunk=4)
    out = jax.block_until_ready(out)
    assert out.shape == (B, OUT_SIZE)
    assert jnp.allclose(out, ref, atol=1e-4, rtol=1e-4), "f32 kernel mismatch vs JAX reference"

    # bf16 matmul inputs / f32 accumulation (recommended on v6e/v7x), looser tolerance.
    params_bf16 = dict(params)
    params_bf16["w_ih"] = params["w_ih"].astype(jnp.bfloat16)
    params_bf16["w_hh"] = params["w_hh"].astype(jnp.bfloat16)
    out_bf16 = jax.block_until_ready(rnn_forward(x, params_bf16, chunk=4))
    assert jnp.allclose(out_bf16, ref, atol=5e-2, rtol=5e-2), "bf16 kernel mismatch vs JAX reference"

    print("KERNEL_OK")
</pallas_src>

<mosaic_0001>
module attributes {stable_mosaic.version = 11 : i64} {
  func.func @_lstm_last_step_kernel(%arg0: i32, %arg1: memref<8x26xf32, #tpu.memory_space<vmem>>, %arg2: memref<26x128xf32, #tpu.memory_space<vmem>>, %arg3: memref<32x128xf32, #tpu.memory_space<vmem>>, %arg4: memref<1x128xf32, #tpu.memory_space<vmem>>, %arg5: memref<32x9xf32, #tpu.memory_space<vmem>>, %arg6: memref<1x9xf32, #tpu.memory_space<vmem>>, %arg7: memref<2x9xf32, #tpu.memory_space<vmem>>, %arg8: memref<2x32xf32, #tpu.memory_space<vmem>>, %arg9: memref<2x32xf32, #tpu.memory_space<vmem>>) attributes {dimension_semantics = [#tpu.dimension_semantics<arbitrary>], iteration_bounds = array<i64: 2>, scalar_prefetch = 0 : i64, scratch_operands = 2 : i64, tpu.core_type = #tpu.core_type<tc>, window_params = [{transform_indices = @transform_0, window_bounds = array<i64: 8, 26>}, {pipeline_mode = #tpu.pipeline_mode<synchronous>, transform_indices = @transform_1, window_bounds = array<i64: 26, 128>}, {pipeline_mode = #tpu.pipeline_mode<synchronous>, transform_indices = @transform_2, window_bounds = array<i64: 32, 128>}, {pipeline_mode = #tpu.pipeline_mode<synchronous>, transform_indices = @transform_3, window_bounds = array<i64: 1, 128>}, {pipeline_mode = #tpu.pipeline_mode<synchronous>, transform_indices = @transform_4, window_bounds = array<i64: 32, 9>}, {pipeline_mode = #tpu.pipeline_mode<synchronous>, transform_indices = @transform_5, window_bounds = array<i64: 1, 9>}, {pipeline_mode = #tpu.pipeline_mode<synchronous>, transform_indices = @transform_6, window_bounds = array<i64: 2, 9>}]} {
    %c0_i32 = arith.constant 0 : i32
    %0 = arith.cmpi eq, %arg0, %c0_i32 : i32
    %1 = arith.extui %0 : i1 to i32
    %c0_i32_0 = arith.constant 0 : i32
    %2 = arith.cmpi ne, %1, %c0_i32_0 : i32
    scf.if %2 {
      %cst_33 = arith.constant 0.000000e+00 : f32
      %129 = vector.broadcast %cst_33 : f32 to vector<2x32xf32>
      %c0_34 = arith.constant 0 : index
      %c0_35 = arith.constant 0 : index
      %130 = vector.load %arg8[%c0_34, %c0_35] : memref<2x32xf32, #tpu.memory_space<vmem>>, vector<2x32xf32>
      tpu.vector_store %arg8[%c0_34, %c0_35], %129 {strides = array<i32>} : memref<2x32xf32, #tpu.memory_space<vmem>>, vector<2x32xf32>,
      %cst_36 = arith.constant 0.000000e+00 : f32
      %131 = vector.broadcast %cst_36 : f32 to vector<2x32xf32>
      %c0_37 = arith.constant 0 : index
      %c0_38 = arith.constant 0 : index
      %132 = vector.load %arg9[%c0_37, %c0_38] : memref<2x32xf32, #tpu.memory_space<vmem>>, vector<2x32xf32>
      tpu.vector_store %arg9[%c0_37, %c0_38], %131 {strides = array<i32>} : memref<2x32xf32, #tpu.memory_space<vmem>>, vector<2x32xf32>,
    } else {
    }
    %c0 = arith.constant 0 : index
    %c0_1 = arith.constant 0 : index
    %3 = vector.load %arg1[%c0, %c0_1] : memref<8x26xf32, #tpu.memory_space<vmem>>, vector<8x26xf32>
    %c0_2 = arith.constant 0 : index
    %c0_3 = arith.constant 0 : index
    %4 = vector.load %arg2[%c0_2, %c0_3] : memref<26x128xf32, #tpu.memory_space<vmem>>, vector<26x128xf32>
    %cst = arith.constant dense<0.000000e+00> : vector<8x128xf32>
    %5 = tpu.matmul %3, %4, %cst {dimension_numbers = #tpu.dot_dimension_numbers<[1], [0], [0], [1], [0, 0, 1, 1], [], []>} : vector<8x26xf32>, vector<26x128xf32>, vector<8x128xf32> -> vector<8x128xf32>
    %c0_4 = arith.constant 0 : index
    %c0_5 = arith.constant 0 : index
    %6 = vector.load %arg4[%c0_4, %c0_5] : memref<1x128xf32, #tpu.memory_space<vmem>>, vector<1x128xf32>
    %7 = vector.broadcast %6 : vector<1x128xf32> to vector<8x128xf32>
    %8 = arith.addf %5, %7 : vector<8x128xf32>
    %c0_6 = arith.constant 0 : index
    %c0_7 = arith.constant 0 : index
    %9 = vector.load %arg3[%c0_6, %c0_7] : memref<32x128xf32, #tpu.memory_space<vmem>>, vector<32x128xf32>
    %c0_8 = arith.constant 0 : index
    %c0_9 = arith.constant 0 : index
    %10 = vector.load %arg8[%c0_8, %c0_9] : memref<2x32xf32, #tpu.memory_space<vmem>>, vector<2x32xf32>
    %c0_10 = arith.constant 0 : index
    %c0_11 = arith.constant 0 : index
    %11 = vector.load %arg9[%c0_10, %c0_11] : memref<2x32xf32, #tpu.memory_space<vmem>>, vector<2x32xf32>
    %12 = vector.extract_strided_slice %8 {offsets = [0, 0], sizes = [2, 128], strides = [1, 1]} : vector<8x128xf32> to vector<2x128xf32>
    %cst_12 = arith.constant dense<0.000000e+00> : vector<2x128xf32>
    %13 = tpu.matmul %10, %9, %cst_12 {dimension_numbers = #tpu.dot_dimension_numbers<[1], [0], [0], [1], [0, 0, 1, 1], [], []>} : vector<2x32xf32>, vector<32x128xf32>, vector<2x128xf32> -> vector<2x128xf32>
    %14 = arith.addf %12, %13 : vector<2x128xf32>
    %15 = vector.extract_strided_slice %14 {offsets = [0, 0], sizes = [2, 32], strides = [1, 1]} : vector<2x128xf32> to vector<2x32xf32>
    %16 = arith.negf %15 : vector<2x32xf32>
    %17 = math.exp %16 : vector<2x32xf32>
    %cst_13 = arith.constant 1.000000e+00 : f32
    %18 = vector.broadcast %cst_13 : f32 to vector<2x32xf32>
    %19 = arith.addf %18, %17 : vector<2x32xf32>
    %20 = arith.divf %18, %19 : vector<2x32xf32>
    %21 = vector.extract_strided_slice %14 {offsets = [0, 32], sizes = [2, 32], strides = [1, 1]} : vector<2x128xf32> to vector<2x32xf32>
    %22 = arith.negf %21 : vector<2x32xf32>
    %23 = math.exp %22 : vector<2x32xf32>
    %cst_14 = arith.constant 1.000000e+00 : f32
    %24 = vector.broadcast %cst_14 : f32 to vector<2x32xf32>
    %25 = arith.addf %24, %23 : vector<2x32xf32>
    %26 = arith.divf %24, %25 : vector<2x32xf32>
    %27 = vector.extract_strided_slice %14 {offsets = [0, 64], sizes = [2, 32], strides = [1, 1]} : vector<2x128xf32> to vector<2x32xf32>
    %28 = math.tanh %27 : vector<2x32xf32>
    %29 = vector.extract_strided_slice %14 {offsets = [0, 96], sizes = [2, 32], strides = [1, 1]} : vector<2x128xf32> to vector<2x32xf32>
    %30 = arith.negf %29 : vector<2x32xf32>
    %31 = math.exp %30 : vector<2x32xf32>
    %cst_15 = arith.constant 1.000000e+00 : f32
    %32 = vector.broadcast %cst_15 : f32 to vector<2x32xf32>
    %33 = arith.addf %32, %31 : vector<2x32xf32>
    %34 = arith.divf %32, %33 : vector<2x32xf32>
    %35 = arith.mulf %26, %11 : vector<2x32xf32>
    %36 = arith.mulf %20, %28 : vector<2x32xf32>
    %37 = arith.addf %35, %36 : vector<2x32xf32>
    %38 = math.tanh %37 : vector<2x32xf32>
    %39 = arith.mulf %34, %38 : vector<2x32xf32>
    %40 = vector.extract_strided_slice %8 {offsets = [2, 0], sizes = [2, 128], strides = [1, 1]} : vector<8x128xf32> to vector<2x128xf32>
    %cst_16 = arith.constant dense<0.000000e+00> : vector<2x128xf32>
    %41 = tpu.matmul %39, %9, %cst_16 {dimension_numbers = #tpu.dot_dimension_numbers<[1], [0], [0], [1], [0, 0, 1, 1], [], []>} : vector<2x32xf32>, vector<32x128xf32>, vector<2x128xf32> -> vector<2x128xf32>
    %42 = arith.addf %40, %41 : vector<2x128xf32>
    %43 = vector.extract_strided_slice %42 {offsets = [0, 0], sizes = [2, 32], strides = [1, 1]} : vector<2x128xf32> to vector<2x32xf32>
    %44 = arith.negf %43 : vector<2x32xf32>
    %45 = math.exp %44 : vector<2x32xf32>
    %cst_17 = arith.constant 1.000000e+00 : f32
    %46 = vector.broadcast %cst_17 : f32 to vector<2x32xf32>
    %47 = arith.addf %46, %45 : vector<2x32xf32>
    %48 = arith.divf %46, %47 : vector<2x32xf32>
    %49 = vector.extract_strided_slice %42 {offsets = [0, 32], sizes = [2, 32], strides = [1, 1]} : vector<2x128xf32> to vector<2x32xf32>
    %50 = arith.negf %49 : vector<2x32xf32>
    %51 = math.exp %50 : vector<2x32xf32>
    %cst_18 = arith.constant 1.000000e+00 : f32
    %52 = vector.broadcast %cst_18 : f32 to vector<2x32xf32>
    %53 = arith.addf %52, %51 : vector<2x32xf32>
    %54 = arith.divf %52, %53 : vector<2x32xf32>
    %55 = vector.extract_strided_slice %42 {offsets = [0, 64], sizes = [2, 32], strides = [1, 1]} : vector<2x128xf32> to vector<2x32xf32>
    %56 = math.tanh %55 : vector<2x32xf32>
    %57 = vector.extract_strided_slice %42 {offsets = [0, 96], sizes = [2, 32], strides = [1, 1]} : vector<2x128xf32> to vector<2x32xf32>
    %58 = arith.negf %57 : vector<2x32xf32>
    %59 = math.exp %58 : vector<2x32xf32>
    %cst_19 = arith.constant 1.000000e+00 : f32
    %60 = vector.broadcast %cst_19 : f32 to vector<2x32xf32>
    %61 = arith.addf %60, %59 : vector<2x32xf32>
    %62 = arith.divf %60, %61 : vector<2x32xf32>
    %63 = arith.mulf %54, %37 : vector<2x32xf32>
    %64 = arith.mulf %48, %56 : vector<2x32xf32>
    %65 = arith.addf %63, %64 : vector<2x32xf32>
    %66 = math.tanh %65 : vector<2x32xf32>
    %67 = arith.mulf %62, %66 : vector<2x32xf32>
    %68 = vector.extract_strided_slice %8 {offsets = [4, 0], sizes = [2, 128], strides = [1, 1]} : vector<8x128xf32> to vector<2x128xf32>
    %cst_20 = arith.constant dense<0.000000e+00> : vector<2x128xf32>
    %69 = tpu.matmul %67, %9, %cst_20 {dimension_numbers = #tpu.dot_dimension_numbers<[1], [0], [0], [1], [0, 0, 1, 1], [], []>} : vector<2x32xf32>, vector<32x128xf32>, vector<2x128xf32> -> vector<2x128xf32>
    %70 = arith.addf %68, %69 : vector<2x128xf32>
    %71 = vector.extract_strided_slice %70 {offsets = [0, 0], sizes = [2, 32], strides = [1, 1]} : vector<2x128xf32> to vector<2x32xf32>
    %72 = arith.negf %71 : vector<2x32xf32>
    %73 = math.exp %72 : vector<2x32xf32>
    %cst_21 = arith.constant 1.000000e+00 : f32
    %74 = vector.broadcast %cst_21 : f32 to vector<2x32xf32>
    %75 = arith.addf %74, %73 : vector<2x32xf32>
    %76 = arith.divf %74, %75 : vector<2x32xf32>
    %77 = vector.extract_strided_slice %70 {offsets = [0, 32], sizes = [2, 32], strides = [1, 1]} : vector<2x128xf32> to vector<2x32xf32>
    %78 = arith.negf %77 : vector<2x32xf32>
    %79 = math.exp %78 : vector<2x32xf32>
    %cst_22 = arith.constant 1.000000e+00 : f32
    %80 = vector.broadcast %cst_22 : f32 to vector<2x32xf32>
    %81 = arith.addf %80, %79 : vector<2x32xf32>
    %82 = arith.divf %80, %81 : vector<2x32xf32>
    %83 = vector.extract_strided_slice %70 {offsets = [0, 64], sizes = [2, 32], strides = [1, 1]} : vector<2x128xf32> to vector<2x32xf32>
    %84 = math.tanh %83 : vector<2x32xf32>
    %85 = vector.extract_strided_slice %70 {offsets = [0, 96], sizes = [2, 32], strides = [1, 1]} : vector<2x128xf32> to vector<2x32xf32>
    %86 = arith.negf %85 : vector<2x32xf32>
    %87 = math.exp %86 : vector<2x32xf32>
    %cst_23 = arith.constant 1.000000e+00 : f32
    %88 = vector.broadcast %cst_23 : f32 to vector<2x32xf32>
    %89 = arith.addf %88, %87 : vector<2x32xf32>
    %90 = arith.divf %88, %89 : vector<2x32xf32>
    %91 = arith.mulf %82, %65 : vector<2x32xf32>
    %92 = arith.mulf %76, %84 : vector<2x32xf32>
    %93 = arith.addf %91, %92 : vector<2x32xf32>
    %94 = math.tanh %93 : vector<2x32xf32>
    %95 = arith.mulf %90, %94 : vector<2x32xf32>
    %96 = vector.extract_strided_slice %8 {offsets = [6, 0], sizes = [2, 128], strides = [1, 1]} : vector<8x128xf32> to vector<2x128xf32>
    %cst_24 = arith.constant dense<0.000000e+00> : vector<2x128xf32>
    %97 = tpu.matmul %95, %9, %cst_24 {dimension_numbers = #tpu.dot_dimension_numbers<[1], [0], [0], [1], [0, 0, 1, 1], [], []>} : vector<2x32xf32>, vector<32x128xf32>, vector<2x128xf32> -> vector<2x128xf32>
    %98 = arith.addf %96, %97 : vector<2x128xf32>
    %99 = vector.extract_strided_slice %98 {offsets = [0, 0], sizes = [2, 32], strides = [1, 1]} : vector<2x128xf32> to vector<2x32xf32>
    %100 = arith.negf %99 : vector<2x32xf32>
    %101 = math.exp %100 : vector<2x32xf32>
    %cst_25 = arith.constant 1.000000e+00 : f32
    %102 = vector.broadcast %cst_25 : f32 to vector<2x32xf32>
    %103 = arith.addf %102, %101 : vector<2x32xf32>
    %104 = arith.divf %102, %103 : vector<2x32xf32>
    %105 = vector.extract_strided_slice %98 {offsets = [0, 32], sizes = [2, 32], strides = [1, 1]} : vector<2x128xf32> to vector<2x32xf32>
    %106 = arith.negf %105 : vector<2x32xf32>
    %107 = math.exp %106 : vector<2x32xf32>
    %cst_26 = arith.constant 1.000000e+00 : f32
    %108 = vector.broadcast %cst_26 : f32 to vector<2x32xf32>
    %109 = arith.addf %108, %107 : vector<2x32xf32>
    %110 = arith.divf %108, %109 : vector<2x32xf32>
    %111 = vector.extract_strided_slice %98 {offsets = [0, 64], sizes = [2, 32], strides = [1, 1]} : vector<2x128xf32> to vector<2x32xf32>
    %112 = math.tanh %111 : vector<2x32xf32>
    %113 = vector.extract_strided_slice %98 {offsets = [0, 96], sizes = [2, 32], strides = [1, 1]} : vector<2x128xf32> to vector<2x32xf32>
    %114 = arith.negf %113 : vector<2x32xf32>
    %115 = math.exp %114 : vector<2x32xf32>
    %cst_27 = arith.constant 1.000000e+00 : f32
    %116 = vector.broadcast %cst_27 : f32 to vector<2x32xf32>
    %117 = arith.addf %116, %115 : vector<2x32xf32>
    %118 = arith.divf %116, %117 : vector<2x32xf32>
    %119 = arith.mulf %110, %93 : vector<2x32xf32>
    %120 = arith.mulf %104, %112 : vector<2x32xf32>
    %121 = arith.addf %119, %120 : vector<2x32xf32>
    %122 = math.tanh %121 : vector<2x32xf32>
    %123 = arith.mulf %118, %122 : vector<2x32xf32>
    %c0_28 = arith.constant 0 : index
    %c0_29 = arith.constant 0 : index
    %124 = vector.load %arg8[%c0_28, %c0_29] : memref<2x32xf32, #tpu.memory_space<vmem>>, vector<2x32xf32>
    tpu.vector_store %arg8[%c0_28, %c0_29], %123 {strides = array<i32>} : memref<2x32xf32, #tpu.memory_space<vmem>>, vector<2x32xf32>,
    %c0_30 = arith.constant 0 : index
    %c0_31 = arith.constant 0 : index
    %125 = vector.load %arg9[%c0_30, %c0_31] : memref<2x32xf32, #tpu.memory_space<vmem>>, vector<2x32xf32>
    tpu.vector_store %arg9[%c0_30, %c0_31], %121 {strides = array<i32>} : memref<2x32xf32, #tpu.memory_space<vmem>>, vector<2x32xf32>,
    %c1_i32 = arith.constant 1 : i32
    %126 = arith.cmpi eq, %arg0, %c1_i32 : i32
    %127 = arith.extui %126 : i1 to i32
    %c0_i32_32 = arith.constant 0 : i32
    %128 = arith.cmpi ne, %127, %c0_i32_32 : i32
    scf.if %128 {
      %c0_33 = arith.constant 0 : index
      %c0_34 = arith.constant 0 : index
      %129 = vector.load %arg5[%c0_33, %c0_34] : memref<32x9xf32, #tpu.memory_space<vmem>>, vector<32x9xf32>
      %cst_35 = arith.constant dense<0.000000e+00> : vector<2x9xf32>
      %130 = tpu.matmul %123, %129, %cst_35 {dimension_numbers = #tpu.dot_dimension_numbers<[1], [0], [0], [1], [0, 0, 1, 1], [], []>} : vector<2x32xf32>, vector<32x9xf32>, vector<2x9xf32> -> vector<2x9xf32>
      %c0_36 = arith.constant 0 : index
      %c0_37 = arith.constant 0 : index
      %131 = vector.load %arg6[%c0_36, %c0_37] : memref<1x9xf32, #tpu.memory_space<vmem>>, vector<1x9xf32>
      %132 = vector.broadcast %131 : vector<1x9xf32> to vector<2x9xf32>
      %133 = arith.addf %130, %132 : vector<2x9xf32>
      %c0_38 = arith.constant 0 : index
      %c0_39 = arith.constant 0 : index
      %134 = vector.load %arg7[%c0_38, %c0_39] : memref<2x9xf32, #tpu.memory_space<vmem>>, vector<2x9xf32>
      tpu.vector_store %arg7[%c0_38, %c0_39], %133 {strides = array<i32>} : memref<2x9xf32, #tpu.memory_space<vmem>>, vector<2x9xf32>,
    } else {
    }
    return
  }
  func.func @transform_0(%arg0: i32) -> (i32, i32) {
    %c0_i32 = arith.constant 0 : i32
    %c0_i32_0 = arith.constant 0 : i32
    return %arg0, %c0_i32 : i32, i32
  }
  func.func @transform_1(%arg0: i32) -> (i32, i32) {
    %c0_i32 = arith.constant 0 : i32
    %c0_i32_0 = arith.constant 0 : i32
    %c0_i32_1 = arith.constant 0 : i32
    return %c0_i32, %c0_i32_0 : i32, i32
  }
  func.func @transform_2(%arg0: i32) -> (i32, i32) {
    %c0_i32 = arith.constant 0 : i32
    %c0_i32_0 = arith.constant 0 : i32
    %c0_i32_1 = arith.constant 0 : i32
    return %c0_i32, %c0_i32_0 : i32, i32
  }
  func.func @transform_3(%arg0: i32) -> (i32, i32) {
    %c0_i32 = arith.constant 0 : i32
    %c0_i32_0 = arith.constant 0 : i32
    %c0_i32_1 = arith.constant 0 : i32
    return %c0_i32, %c0_i32_0 : i32, i32
  }
  func.func @transform_4(%arg0: i32) -> (i32, i32) {
    %c0_i32 = arith.constant 0 : i32
    %c0_i32_0 = arith.constant 0 : i32
    %c0_i32_1 = arith.constant 0 : i32
    return %c0_i32, %c0_i32_0 : i32, i32
  }
  func.func @transform_5(%arg0: i32) -> (i32, i32) {
    %c0_i32 = arith.constant 0 : i32
    %c0_i32_0 = arith.constant 0 : i32
    %c0_i32_1 = arith.constant 0 : i32
    return %c0_i32, %c0_i32_0 : i32, i32
  }
  func.func @transform_6(%arg0: i32) -> (i32, i32) {
    %c0_i32 = arith.constant 0 : i32
    %c0_i32_0 = arith.constant 0 : i32
    %c0_i32_1 = arith.constant 0 : i32
    return %c0_i32, %c0_i32_0 : i32, i32
  }
}

</mosaic_0001>

<llo_original>
// kernel: tpu_custom_call.1
$region0: #{tpu_custom_call.1}
  #allocation0 [shape = 'u32[]', space=smem, size = 0x4, offset = 0x4, fixed_abs, tag = 'smem constant byte address 0x4 - core index']
  #allocation1 [shape = 'u32[144,128]{1,0:T(1,128)}', space=vmem, size = 0x12000, scoped, tag = 'internal scratch']
  #allocation2 [shape = 'f32[2,32]{1,0:T(2,128)}', space=vmem, size = 0x400, scoped, tag = 'scratch operand']
  #allocation3 [shape = 'f32[2,32]{1,0:T(2,128)}', space=vmem, size = 0x400, scoped, tag = 'scratch operand']
  %s0 = inlined_call_operand.vmem [shape: f32[16,26], index: 0, kind: input, shape index: {}]
  %s1 = inlined_call_operand.vmem [shape: f32[26,128], index: 1, kind: input, shape index: {}]
  %s2 = inlined_call_operand.hbm [shape: f32[32,128], index: 2, kind: input, shape index: {}]
  %s3 = inlined_call_operand.vmem [shape: f32[1,128], index: 3, kind: input, shape index: {}]
  %s4 = inlined_call_operand.vmem [shape: f32[32,9], index: 4, kind: input, shape index: {}]
  %s5 = inlined_call_operand.vmem [shape: f32[1,9], index: 5, kind: input, shape index: {}]
  %s6 = inlined_call_operand.hbm [shape: f32[2,9], index: 6, kind: output, shape index: {}]
  %s7 = sld [smem:[#allocation0]]
  $region69: #{tpu_custom_call.1} parent=0
    _
  %s9 = ssub.s32 1, %s7
  %s10 = scalar_select 0, %s9, %s7
  $region1: #{tpu_custom_call.1} parent=0
    #allocation4 [shape = 'u8[16384]{0}', space=vmem, size = 0x4000, scoped, tag = 'input window, operand 2, single buffered']
    #allocation5 [shape = 's32[2]{0}', space=sflag, size = 0x8, scoped, tag = 'scoped memory for tpu_custom_call.1']
    #allocation6 [shape = 's32[2]{0}', space=sflag, size = 0x8, scoped, tag = 'scoped memory for tpu_custom_call.1']
    #allocation7 [shape = 'u8[1024]{0}', space=vmem, size = 0x400, scoped, tag = 'output window, operand 0, single buffered']
    %11 = vsyncpa [#allocation5], 0
    %12 = vsyncpa [#allocation6], 0
    loop: start=0, step=1, limit=4
    $region2: #{tpu_custom_call.1} parent=1 // loop_pre_header
      _
    $region3: #{tpu_custom_call.1} parent=1 // loop_header
      %s14 = sphi 0, %s18
      %p15 = scmp.ge.s32.totalorder %s14, 4
      %s24 = sphi 0, %s26
      %s27 = sphi 0, %s24
      %s28 = sphi 0, %s27
      %s44 = sphi 0, %s28
      %s48 = sphi 0, %s48
      %s50 = sphi 0, %s48
      %s51 = sphi 0, %s50
      %s65 = sphi 0, %s51
      %s69 = sphi 0, %s69
      %s71 = sphi 0, %s69
      %s72 = sphi 0, %s71
      %s86 = sphi 0, %s72
      %s90 = sphi 0, %s90
      %s92 = sphi 0, %s90
      %s93 = sphi 0, %s92
      %s107 = sphi 0, %s93
      %s111 = sphi 0, %s111
      %s113 = sphi 0, %s111
      %s114 = sphi 0, %s113
      %s128 = sphi 0, %s114
      %s132 = sphi 0, %s132
      %s134 = sphi 0, %s132
      %s135 = sphi 0, %s134
      %s149 = sphi 0, %s135
      %s153 = sphi 0, %s153
      %s155 = sphi 0, %s153
      %s156 = sphi 0, %s155
      %s170 = sphi 0, %s156
    $region4: #{tpu_custom_call.1} parent=1 // loop_header_branch
      %17 = sbr.rel (%p15) target = $region8
    $region5: #{tpu_custom_call.1} parent=1 // loop_body
      %s19 = ssub.s32 %s14, 1
      %s20 = ssub.s32 %s14, 2
      %s21 = sadd.s32 %s14, 1
      %s22 = ssub.s32 %s14, %s21
      %p23 = scmp.eq.s32.totalorder %s22, 0
      %s25 = sadd.s32 %s24, 1
      %s26 = scalar_select %p23, %s24, %s25
      %p29 = pneg %p23
      %p30 = scmp.eq.s32.totalorder %s14, 1
      %p31 = por %p29, %p30
      %p32 = scmp.ne.s32.totalorder %s24, %s27
      %p33 = scmp.eq.s32.totalorder %s14, 0
      %p34 = por %p32, %p33
      %p35 = scmp.ne.s32.totalorder %s24, %s27
      %p36 = scmp.eq.s32.totalorder %s19, 1
      %p37 = por %p35, %p36
      %p38 = scmp.ne.s32.totalorder %s27, %s28
      %p39 = scmp.eq.s32.totalorder %s19, 0
      %p40 = por %p38, %p39
      %p41 = scmp.ne.s32.totalorder %s27, %s28
      %p42 = scmp.eq.s32.totalorder %s20, 1
      %p43 = por %p41, %p42
      %p45 = scmp.ne.s32.totalorder %s28, %s44
      %p46 = scmp.eq.s32.totalorder %s20, 0
      %p47 = por %p45, %p46
      %s49 = sadd.s32 %s48, 1
      %p52 = scmp.eq.s32.totalorder %s14, 1
      %p53 = scmp.ne.s32.totalorder %s48, %s50
      %p54 = scmp.eq.s32.totalorder %s14, 0
      %p55 = por %p53, %p54
      %p56 = scmp.ne.s32.totalorder %s48, %s50
      %p57 = scmp.eq.s32.totalorder %s19, 1
      %p58 = por %p56, %p57
      %p59 = scmp.ne.s32.totalorder %s50, %s51
      %p60 = scmp.eq.s32.totalorder %s19, 0
      %p61 = por %p59, %p60
      %p62 = scmp.ne.s32.totalorder %s50, %s51
      %p63 = scmp.eq.s32.totalorder %s20, 1
      %p64 = por %p62, %p63
      %p66 = scmp.ne.s32.totalorder %s51, %s65
      %p67 = scmp.eq.s32.totalorder %s20, 0
      %p68 = por %p66, %p67
      %s70 = sadd.s32 %s69, 1
      %p73 = scmp.eq.s32.totalorder %s14, 1
      %p74 = scmp.ne.s32.totalorder %s69, %s71
      %p75 = scmp.eq.s32.totalorder %s14, 0
      %p76 = por %p74, %p75
      %p77 = scmp.ne.s32.totalorder %s69, %s71
      %p78 = scmp.eq.s32.totalorder %s19, 1
      %p79 = por %p77, %p78
      %p80 = scmp.ne.s32.totalorder %s71, %s72
      %p81 = scmp.eq.s32.totalorder %s19, 0
      %p82 = por %p80, %p81
      %p83 = scmp.ne.s32.totalorder %s71, %s72
      %p84 = scmp.eq.s32.totalorder %s20, 1
      %p85 = por %p83, %p84
      %p87 = scmp.ne.s32.totalorder %s72, %s86
      %p88 = scmp.eq.s32.totalorder %s20, 0
      %p89 = por %p87, %p88
      %s91 = sadd.s32 %s90, 1
      %p94 = scmp.eq.s32.totalorder %s14, 1
      %p95 = scmp.ne.s32.totalorder %s90, %s92
      %p96 = scmp.eq.s32.totalorder %s14, 0
      %p97 = por %p95, %p96
      %p98 = scmp.ne.s32.totalorder %s90, %s92
      %p99 = scmp.eq.s32.totalorder %s19, 1
      %p100 = por %p98, %p99
      %p101 = scmp.ne.s32.totalorder %s92, %s93
      %p102 = scmp.eq.s32.totalorder %s19, 0
      %p103 = por %p101, %p102
      %p104 = scmp.ne.s32.totalorder %s92, %s93
      %p105 = scmp.eq.s32.totalorder %s20, 1
      %p106 = por %p104, %p105
      %p108 = scmp.ne.s32.totalorder %s93, %s107
      %p109 = scmp.eq.s32.totalorder %s20, 0
      %p110 = por %p108, %p109
      %s112 = sadd.s32 %s111, 1
      %p115 = scmp.eq.s32.totalorder %s14, 1
      %p116 = scmp.ne.s32.totalorder %s111, %s113
      %p117 = scmp.eq.s32.totalorder %s14, 0
      %p118 = por %p116, %p117
      %p119 = scmp.ne.s32.totalorder %s111, %s113
      %p120 = scmp.eq.s32.totalorder %s19, 1
      %p121 = por %p119, %p120
      %p122 = scmp.ne.s32.totalorder %s113, %s114
      %p123 = scmp.eq.s32.totalorder %s19, 0
      %p124 = por %p122, %p123
      %p125 = scmp.ne.s32.totalorder %s113, %s114
      %p126 = scmp.eq.s32.totalorder %s20, 1
      %p127 = por %p125, %p126
      %p129 = scmp.ne.s32.totalorder %s114, %s128
      %p130 = scmp.eq.s32.totalorder %s20, 0
      %p131 = por %p129, %p130
      %s133 = sadd.s32 %s132, 1
      %p136 = scmp.eq.s32.totalorder %s14, 1
      %p137 = scmp.ne.s32.totalorder %s132, %s134
      %p138 = scmp.eq.s32.totalorder %s14, 0
      %p139 = por %p137, %p138
      %p140 = scmp.ne.s32.totalorder %s132, %s134
      %p141 = scmp.eq.s32.totalorder %s19, 1
      %p142 = por %p140, %p141
      %p143 = scmp.ne.s32.totalorder %s134, %s135
      %p144 = scmp.eq.s32.totalorder %s19, 0
      %p145 = por %p143, %p144
      %p146 = scmp.ne.s32.totalorder %s134, %s135
      %p147 = scmp.eq.s32.totalorder %s20, 1
      %p148 = por %p146, %p147
      %p150 = scmp.ne.s32.totalorder %s135, %s149
      %p151 = scmp.eq.s32.totalorder %s20, 0
      %p152 = por %p150, %p151
      %s154 = sadd.s32 %s153, 1
      %p157 = scmp.eq.s32.totalorder %s14, 1
      %p158 = scmp.ne.s32.totalorder %s153, %s155
      %p159 = scmp.eq.s32.totalorder %s14, 0
      %p160 = por %p158, %p159
      %p161 = scmp.ne.s32.totalorder %s153, %s155
      %p162 = scmp.eq.s32.totalorder %s19, 1
      %p163 = por %p161, %p162
      %p164 = scmp.ne.s32.totalorder %s155, %s156
      %p165 = scmp.eq.s32.totalorder %s19, 0
      %p166 = por %p164, %p165
      %p167 = scmp.ne.s32.totalorder %s155, %s156
      %p168 = scmp.eq.s32.totalorder %s20, 1
      %p169 = por %p167, %p168
      %p171 = scmp.ne.s32.totalorder %s156, %s170
      %p172 = scmp.eq.s32.totalorder %s20, 0
      %p173 = por %p171, %p172
      %p174 = scmp.le.s32.totalorder 1, %s14
      %p175 = scmp.lt.s32.totalorder %s14, 3
      %p176 = pnand %p174, %p175
      %p177 = pneg %p176
      // Predicated region
      $region9: #{tpu_custom_call.1} parent=5 // pred_check
        _
      $region10: #{tpu_custom_call.1} parent=5 // pred_check_branch
        %179 = sbr.rel (%p176) target = $region12
      $region11: #{tpu_custom_call.1} parent=5 // pred_region
        %s180 = ssub.s32 %s14, 1
        // Predicated region
        $region13: #{tpu_custom_call.1} parent=11 // pred_check
          %p181 = pneg %p61
        $region14: #{tpu_custom_call.1} parent=11 // pred_check_branch
          %183 = sbr.rel (%p181) target = $region16
        $region15: #{tpu_custom_call.1} parent=11 // pred_region
          _
        $region16: #{tpu_custom_call.1} parent=11 // pred_fallthru
          _
        // Predicated region
        $region17: #{tpu_custom_call.1} parent=11 // pred_check
          %p184 = pneg %p82
        $region18: #{tpu_custom_call.1} parent=11 // pred_check_branch
          %186 = sbr.rel (%p184) target = $region20
        $region19: #{tpu_custom_call.1} parent=11 // pred_region
          %s188 = ssub.s32 512, 512
          %189 = vsyncadd [#allocation5], %s188
          %s190 = sshll.u32 [#allocation4], 4
          %s191 = int_to_ptr.vmem [resolvable:$true] %s190
          %196 = dma.hbm_to_vmem [thread:$0]  %s2, 512, %s191, [#allocation5], 128, 128, 8
        $region20: #{tpu_custom_call.1} parent=11 // pred_fallthru
          _
        // Predicated region
        $region21: #{tpu_custom_call.1} parent=11 // pred_check
          %p197 = pneg %p103
        $region22: #{tpu_custom_call.1} parent=11 // pred_check_branch
          %199 = sbr.rel (%p197) target = $region24
        $region23: #{tpu_custom_call.1} parent=11 // pred_region
          _
        $region24: #{tpu_custom_call.1} parent=11 // pred_fallthru
          _
        // Predicated region
        $region25: #{tpu_custom_call.1} parent=11 // pred_check
          %p200 = pneg %p124
        $region26: #{tpu_custom_call.1} parent=11 // pred_check_branch
          %202 = sbr.rel (%p200) target = $region28
        $region27: #{tpu_custom_call.1} parent=11 // pred_region
          _
        $region28: #{tpu_custom_call.1} parent=11 // pred_fallthru
          _
        // Predicated region
        $region29: #{tpu_custom_call.1} parent=11 // pred_check
          %p203 = pneg %p145
        $region30: #{tpu_custom_call.1} parent=11 // pred_check_branch
          %205 = sbr.rel (%p203) target = $region32
        $region31: #{tpu_custom_call.1} parent=11 // pred_region
          _
        $region32: #{tpu_custom_call.1} parent=11 // pred_fallthru
          _
      $region12: #{tpu_custom_call.1} parent=5 // pred_fallthru
        _
      %p206 = scmp.lt.s32.totalorder %s14, 2
      // Predicated region
      $region33: #{tpu_custom_call.1} parent=5 // pred_check
        %p207 = pneg %p206
      $region34: #{tpu_custom_call.1} parent=5 // pred_check_branch
        %209 = sbr.rel (%p207) target = $region36
      $region35: #{tpu_custom_call.1} parent=5 // pred_region
        // Predicated region
        $region37: #{tpu_custom_call.1} parent=35 // pred_check
          %p210 = pneg %p34
        $region38: #{tpu_custom_call.1} parent=35 // pred_check_branch
          %212 = sbr.rel (%p210) target = $region40
        $region39: #{tpu_custom_call.1} parent=35 // pred_region
          %p213 = scmp.lt.s32.totalorder %s14, 1
          %s214 = scalar_select %p213, %s14, 1
          %s215 = smul.addr %s214, 8
          %s216 = scalar_lea.vmem %s0, %s215
        $region40: #{tpu_custom_call.1} parent=35 // pred_fallthru
          _
      $region36: #{tpu_custom_call.1} parent=5 // pred_fallthru
        _
      %p217 = scmp.le.s32.totalorder 1, %s14
      %p218 = scmp.lt.s32.totalorder %s14, 3
      %p219 = pnand %p217, %p218
      %p220 = pneg %p219
      // Predicated region
      $region41: #{tpu_custom_call.1} parent=5 // pred_check
        _
      $region42: #{tpu_custom_call.1} parent=5 // pred_check_branch
        %222 = sbr.rel (%p219) target = $region44
      $region43: #{tpu_custom_call.1} parent=5 // pred_region
        %s223 = ssub.s32 %s14, 1
        // Predicated region
        $region45: #{tpu_custom_call.1} parent=43 // pred_check
          %p224 = pneg %p82
        $region46: #{tpu_custom_call.1} parent=43 // pred_check_branch
          %226 = sbr.rel (%p224) target = $region48
        $region47: #{tpu_custom_call.1} parent=43 // pred_region
          %227 = dma.done [#allocation5], 512
        $region48: #{tpu_custom_call.1} parent=43 // pred_fallthru
          _
        %p228 = scmp.lt.s32.totalorder %s19, 1
        %s229 = scalar_select %p228, %s19, 1
        %s230 = smul.addr %s229, 8
        %s231 = scalar_lea.vmem %s0, %s230
        %p232 = pneg %p40
        %p233 = pneg %p37
        %p234 = pneg %p61
        %p235 = pneg %p58
        %p236 = pneg %p82
        %p237 = pneg %p79
        %p238 = pneg %p103
        %p239 = pneg %p100
        %p240 = pneg %p124
        %p241 = pneg %p121
        %p242 = pneg %p145
        %p243 = pneg %p142
        %p244 = pneg %p166
        %p245 = pneg %p163
        %p246 = scmp.lt.s32.totalorder %s19, 1
        %s247 = scalar_select %p246, %s19, 1
        %s248 = smul.addr %s247, 8
        %s249 = scalar_lea.vmem %s0, %s248
        %p250 = scmp.eq.s32.totalorder %s19, 0
        // Predicated region
        $region49: #{tpu_custom_call.1} parent=43 // pred_check
          %p251 = pneg %p250
        $region50: #{tpu_custom_call.1} parent=43 // pred_check_branch
          %253 = sbr.rel (%p251) target = $region52
        $region51: #{tpu_custom_call.1} parent=43 // pred_region
          %vm254 = vcmask 254976
          %255 = vst.msk [vmem:[#allocation2] sm:$0x3] %vm254, 0.0
          %256 = vst.msk [vmem:[#allocation3] sm:$0x3] %vm254, 0.0
        $region52: #{tpu_custom_call.1} parent=43 // pred_fallthru
          _
        %v257 = vld [vmem:[%s249] sm:$0xff]
        %v258 = vld [vmem:[%s1] sm:$0xff]
        %v259 = vld [vmem:[%s1 + $0x8] sm:$0xff]
        %v260 = vld [vmem:[%s1 + $0x10] sm:$0xff]
        %v261 = vld [vmem:[%s1 + $0x18] sm:$0x3]
        %v262 = vld [vmem:[%s3] sm:$0x1]
        %v264 = vlaneseq
        %v265 = vshrl.u32 %v264, 7
        %v266 = vsub.s32 0, %v265
        %v267 = vrot.slane %v262, %v266
        %vm269 = vcmask 211968
        %v271 = vsel %vm269, %v257, 0
        %vm273 = vcmask 1041408
        %v275 = vsel %vm273, %v261, 0
        %277 = vmatprep.subr.mxu0 0.0
        %278 = vmatpush1.msra.mxu0 %v258
        %279 = vmatprep.subr.mxu0 0.0
        %280 = vmatpush1.msra.mxu0 %v259
        %281 = vmatprep.subr.mxu0 0.0
        %282 = vmatpush1.msra.mxu0 %v260
        %283 = vmatprep.subr.mxu0 0.0
        %284 = vmatpush1.msra.mxu0 %v275
        %285 = vmatprep.subr.mxu0 0.0
        %286 = vmatpush1.msra.mxu0 0.0
        %287 = vmatprep.subr.mxu0 0.0
        %288 = vmatpush1.msra.mxu0 0.0
        %289 = vmatprep.subr.mxu0 0.0
        %290 = vmatpush1.msra.mxu0 0.0
        %291 = vmatprep.subr.mxu0 0.0
        %292 = vmatpush1.msra.mxu0 0.0
        %293 = vmatprep.subr.mxu0 0.0
        %294 = vmatpush1.msra.mxu0 0.0
        %295 = vmatprep.subr.mxu0 0.0
        %296 = vmatpush1.msra.mxu0 0.0
        %297 = vmatprep.subr.mxu0 0.0
        %298 = vmatpush1.msra.mxu0 0.0
        %299 = vmatprep.subr.mxu0 0.0
        %300 = vmatpush1.msra.mxu0 0.0
        %301 = vmatprep.subr.mxu0 0.0
        %302 = vmatpush1.msra.mxu0 0.0
        %303 = vmatprep.subr.mxu0 0.0
        %304 = vmatpush1.msra.mxu0 0.0
        %305 = vmatprep.subr.mxu0 0.0
        %306 = vmatpush1.msra.mxu0 0.0
        %307 = vmatprep.subr.mxu0 0.0
        %308 = vmatpush1.msra.mxu0 0.0
        %309 = vmatprep.subr.mxu0 0.0
        %310 = vmatpush1.msra.mxu0 0.0
        %311 = vmatprep.subr.mxu0 0.0
        %312 = vmatpush1.msra.mxu0 0.0
        %313 = vmatprep.subr.mxu0 0.0
        %314 = vmatpush1.msra.mxu0 0.0
        %315 = vmatprep.subr.mxu0 0.0
        %316 = vmatpush1.msra.mxu0 0.0
        %317 = vmatprep.subr.mxu0 0.0
        %318 = vmatpush1.msra.mxu0 0.0
        %319 = vmatprep.subr.mxu0 0.0
        %320 = vmatpush1.msra.mxu0 0.0
        %321 = vmatprep.subr.mxu0 0.0
        %322 = vmatpush1.msra.mxu0 0.0
        %323 = vmatprep.subr.mxu0 0.0
        %324 = vmatpush1.msra.mxu0 0.0
        %325 = vmatprep.subr.mxu0 0.0
        %326 = vmatpush1.msra.mxu0 0.0
        %327 = vmatprep.subr.mxu0 0.0
        %328 = vmatpush1.msra.mxu0 0.0
        %329 = vmatprep.subr.mxu0 0.0
        %330 = vmatpush1.msra.mxu0 0.0
        %331 = vmatprep.subr.mxu0 0.0
        %332 = vmatpush1.msra.mxu0 0.0
        %333 = vmatprep.subr.mxu0 0.0
        %334 = vmatpush1.msra.mxu0 0.0
        %335 = vmatprep.subr.mxu0 0.0
        %336 = vmatpush1.msra.mxu0 0.0
        %337 = vmatprep.subr.mxu0 0.0
        %338 = vmatpush1.msra.mxu0 0.0
        %339 = vmatprep.subr.mxu0 0.0
        %340 = vmatpush1.msra.mxu0 0.0
        %341 = vmatprep.mubr.f32.mxu0 0.0
        %342 = vmatmul.mubr.f32.gmra.mrb[0].mxu0 %v271
        %v343 = vpop.f32.mrb[0].mxu0
        %v344 = vadd.f32 %v267, %v343
        %v345 = vpop.f32.mrb[0].mxu0
        %346 = vdwg.mxu0
        %v347 = vld [vmem:[#allocation4] sm:$0xff]
        %v348 = vld [vmem:[#allocation4 + $0x8] sm:$0xff]
        %v349 = vld [vmem:[#allocation4 + $0x10] sm:$0xff]
        %v350 = vld [vmem:[#allocation4 + $0x18] sm:$0xff]
        %v351 = vld [vmem:[#allocation2] sm:$0x3]
        %v352 = vld [vmem:[#allocation3] sm:$0x3]
        %vm353 = vcmask 261120
        %v355 = vsel %vm353, %v351, 0
        %357 = vmatprep.subr.mxu0 0.0
        %358 = vmatpush1.msra.mxu0 %v347
        %359 = vmatprep.subr.mxu0 0.0
        %360 = vmatpush1.msra.mxu0 %v348
        %361 = vmatprep.subr.mxu0 0.0
        %362 = vmatpush1.msra.mxu0 %v349
        %363 = vmatprep.subr.mxu0 0.0
        %364 = vmatpush1.msra.mxu0 %v350
        %365 = vmatprep.subr.mxu0 0.0
        %366 = vmatpush1.msra.mxu0 0.0
        %367 = vmatprep.subr.mxu0 0.0
        %368 = vmatpush1.msra.mxu0 0.0
        %369 = vmatprep.subr.mxu0 0.0
        %370 = vmatpush1.msra.mxu0 0.0
        %371 = vmatprep.subr.mxu0 0.0
        %372 = vmatpush1.msra.mxu0 0.0
        %373 = vmatprep.subr.mxu0 0.0
        %374 = vmatpush1.msra.mxu0 0.0
        %375 = vmatprep.subr.mxu0 0.0
        %376 = vmatpush1.msra.mxu0 0.0
        %377 = vmatprep.subr.mxu0 0.0
        %378 = vmatpush1.msra.mxu0 0.0
        %379 = vmatprep.subr.mxu0 0.0
        %380 = vmatpush1.msra.mxu0 0.0
        %381 = vmatprep.subr.mxu0 0.0
        %382 = vmatpush1.msra.mxu0 0.0
        %383 = vmatprep.subr.mxu0 0.0
        %384 = vmatpush1.msra.mxu0 0.0
        %385 = vmatprep.subr.mxu0 0.0
        %386 = vmatpush1.msra.mxu0 0.0
        %387 = vmatprep.subr.mxu0 0.0
        %388 = vmatpush1.msra.mxu0 0.0
        %389 = vmatprep.subr.mxu0 0.0
        %390 = vmatpush1.msra.mxu0 0.0
        %391 = vmatprep.subr.mxu0 0.0
        %392 = vmatpush1.msra.mxu0 0.0
        %393 = vmatprep.subr.mxu0 0.0
        %394 = vmatpush1.msra.mxu0 0.0
        %395 = vmatprep.subr.mxu0 0.0
        %396 = vmatpush1.msra.mxu0 0.0
        %397 = vmatprep.subr.mxu0 0.0
        %398 = vmatpush1.msra.mxu0 0.0
        %399 = vmatprep.subr.mxu0 0.0
        %400 = vmatpush1.msra.mxu0 0.0
        %401 = vmatprep.subr.mxu0 0.0
        %402 = vmatpush1.msra.mxu0 0.0
        %403 = vmatprep.subr.mxu0 0.0
        %404 = vmatpush1.msra.mxu0 0.0
        %405 = vmatprep.subr.mxu0 0.0
        %406 = vmatpush1.msra.mxu0 0.0
        %407 = vmatprep.subr.mxu0 0.0
        %408 = vmatpush1.msra.mxu0 0.0
        %409 = vmatprep.subr.mxu0 0.0
        %410 = vmatpush1.msra.mxu0 0.0
        %411 = vmatprep.subr.mxu0 0.0
        %412 = vmatpush1.msra.mxu0 0.0
        %413 = vmatprep.subr.mxu0 0.0
        %414 = vmatpush1.msra.mxu0 0.0
        %415 = vmatprep.subr.mxu0 0.0
        %416 = vmatpush1.msra.mxu0 0.0
        %417 = vmatprep.subr.mxu0 0.0
        %418 = vmatpush1.msra.mxu0 0.0
        %419 = vmatprep.subr.mxu0 0.0
        %420 = vmatpush1.msra.mxu0 0.0
        %421 = vmatprep.mubr.f32.mxu0 0.0
        %422 = vmatmul.mubr.f32.gmra.mrb[0].mxu0 %v355
        %v423 = vpop.f32.mrb[0].mxu0
        %v424 = vadd.f32 0.0, %v423
        %v425 = vpop.f32.mrb[0].mxu0
        %426 = vdwg.mxu0
        %v427 = vadd.f32 %v344, %v424
        %v428 = vxor.u32 %v427, 2147483648
        %v429 = vmul.f32 %v428, 1.442695
        %v430 = vpow.pop %v429
        %v431 = vadd.f32 %v430, 1.0
        %v432 = vrcp.pop %v431
        %v433 = vmul.f32 1.0, %v432
        %v434 = vtanh.pop %v427
        %436 = vrot.lane.b32.xlu0 %v352, 32
        %v437 = vpop.permute.xlu0 %436
        %v439 = vmul.f32 %v433, %v437
        %441 = vrot.lane.b32.xlu0 %v434, 64
        %v442 = vpop.permute.xlu0 %441
        %v444 = vmul.f32 %v433, %v442
        %446 = vrot.lane.b32.xlu0 %v444, 32
        %v447 = vpop.permute.xlu0 %446
        %v449 = vadd.f32 %v439, %v447
        %v450 = vtanh.pop %v449
        %452 = vrot.lane.b32.xlu0 %v450, 64
        %v453 = vpop.permute.xlu0 %452
        %v455 = vmul.f32 %v433, %v453
        %457 = vrot.lane.b32.xlu0 %v455, 32
        %v458 = vpop.permute.xlu0 %457
        %v459 = vsel %vm353, %v458, 0
        %461 = vmatprep.subr.mxu0 0.0
        %462 = vmatpush1.msra.mxu0 %v347
        %463 = vmatprep.subr.mxu0 0.0
        %464 = vmatpush1.msra.mxu0 %v348
        %465 = vmatprep.subr.mxu0 0.0
        %466 = vmatpush1.msra.mxu0 %v349
        %467 = vmatprep.subr.mxu0 0.0
        %468 = vmatpush1.msra.mxu0 %v350
        %469 = vmatprep.subr.mxu0 0.0
        %470 = vmatpush1.msra.mxu0 0.0
        %471 = vmatprep.subr.mxu0 0.0
        %472 = vmatpush1.msra.mxu0 0.0
        %473 = vmatprep.subr.mxu0 0.0
        %474 = vmatpush1.msra.mxu0 0.0
        %475 = vmatprep.subr.mxu0 0.0
        %476 = vmatpush1.msra.mxu0 0.0
        %477 = vmatprep.subr.mxu0 0.0
        %478 = vmatpush1.msra.mxu0 0.0
        %479 = vmatprep.subr.mxu0 0.0
        %480 = vmatpush1.msra.mxu0 0.0
        %481 = vmatprep.subr.mxu0 0.0
        %482 = vmatpush1.msra.mxu0 0.0
        %483 = vmatprep.subr.mxu0 0.0
        %484 = vmatpush1.msra.mxu0 0.0
        %485 = vmatprep.subr.mxu0 0.0
        %486 = vmatpush1.msra.mxu0 0.0
        %487 = vmatprep.subr.mxu0 0.0
        %488 = vmatpush1.msra.mxu0 0.0
        %489 = vmatprep.subr.mxu0 0.0
        %490 = vmatpush1.msra.mxu0 0.0
        %491 = vmatprep.subr.mxu0 0.0
        %492 = vmatpush1.msra.mxu0 0.0
        %493 = vmatprep.subr.mxu0 0.0
        %494 = vmatpush1.msra.mxu0 0.0
        %495 = vmatprep.subr.mxu0 0.0
        %496 = vmatpush1.msra.mxu0 0.0
        %497 = vmatprep.subr.mxu0 0.0
        %498 = vmatpush1.msra.mxu0 0.0
        %499 = vmatprep.subr.mxu0 0.0
        %500 = vmatpush1.msra.mxu0 0.0
        %501 = vmatprep.subr.mxu0 0.0
        %502 = vmatpush1.msra.mxu0 0.0
        %503 = vmatprep.subr.mxu0 0.0
        %504 = vmatpush1.msra.mxu0 0.0
        %505 = vmatprep.subr.mxu0 0.0
        %506 = vmatpush1.msra.mxu0 0.0
        %507 = vmatprep.subr.mxu0 0.0
        %508 = vmatpush1.msra.mxu0 0.0
        %509 = vmatprep.subr.mxu0 0.0
        %510 = vmatpush1.msra.mxu0 0.0
        %511 = vmatprep.subr.mxu0 0.0
        %512 = vmatpush1.msra.mxu0 0.0
        %513 = vmatprep.subr.mxu0 0.0
        %514 = vmatpush1.msra.mxu0 0.0
        %515 = vmatprep.subr.mxu0 0.0
        %516 = vmatpush1.msra.mxu0 0.0
        %517 = vmatprep.subr.mxu0 0.0
        %518 = vmatpush1.msra.mxu0 0.0
        %519 = vmatprep.subr.mxu0 0.0
        %520 = vmatpush1.msra.mxu0 0.0
        %521 = vmatprep.subr.mxu0 0.0
        %522 = vmatpush1.msra.mxu0 0.0
        %523 = vmatprep.subr.mxu0 0.0
        %524 = vmatpush1.msra.mxu0 0.0
        %525 = vmatprep.mubr.f32.mxu0 0.0
        %526 = vmatmul.mubr.f32.gmra.mrb[0].mxu0 %v459
        %v527 = vpop.f32.mrb[0].mxu0
        %v528 = vadd.f32 0.0, %v527
        %v529 = vpop.f32.mrb[0].mxu0
        %530 = vdwg.mxu0
        %v532 = vrot.slane %v528, 6
        %v534 = vadd.f32 %v344, %v532
        %v535 = vxor.u32 %v534, 2147483648
        %v536 = vmul.f32 %v535, 1.442695
        %v537 = vpow.pop %v536
        %v538 = vadd.f32 %v537, 1.0
        %v539 = vrcp.pop %v538
        %v540 = vmul.f32 1.0, %v539
        %v541 = vtanh.pop %v534
        %v543 = vrot.slane %v449, 6
        %v545 = vmul.f32 %v540, %v543
        %547 = vrot.lane.b32.xlu0 %v541, 64
        %v548 = vpop.permute.xlu0 %547
        %v550 = vmul.f32 %v540, %v548
        %552 = vrot.lane.b32.xlu0 %v550, 32
        %v553 = vpop.permute.xlu0 %552
        %v555 = vadd.f32 %v545, %v553
        %v556 = vtanh.pop %v555
        %558 = vrot.lane.b32.xlu0 %v556, 64
        %v559 = vpop.permute.xlu0 %558
        %v561 = vmul.f32 %v540, %v559
        %v563 = vrot.slane %v561, 2
        %564 = vrot.lane.b32.xlu0 %v563, 32
        %v565 = vpop.permute.xlu0 %564
        %v566 = vsel %vm353, %v565, 0
        %568 = vmatprep.subr.mxu0 0.0
        %569 = vmatpush1.msra.mxu0 %v347
        %570 = vmatprep.subr.mxu0 0.0
        %571 = vmatpush1.msra.mxu0 %v348
        %572 = vmatprep.subr.mxu0 0.0
        %573 = vmatpush1.msra.mxu0 %v349
        %574 = vmatprep.subr.mxu0 0.0
        %575 = vmatpush1.msra.mxu0 %v350
        %576 = vmatprep.subr.mxu0 0.0
        %577 = vmatpush1.msra.mxu0 0.0
        %578 = vmatprep.subr.mxu0 0.0
        %579 = vmatpush1.msra.mxu0 0.0
        %580 = vmatprep.subr.mxu0 0.0
        %581 = vmatpush1.msra.mxu0 0.0
        %582 = vmatprep.subr.mxu0 0.0
        %583 = vmatpush1.msra.mxu0 0.0
        %584 = vmatprep.subr.mxu0 0.0
        %585 = vmatpush1.msra.mxu0 0.0
        %586 = vmatprep.subr.mxu0 0.0
        %587 = vmatpush1.msra.mxu0 0.0
        %588 = vmatprep.subr.mxu0 0.0
        %589 = vmatpush1.msra.mxu0 0.0
        %590 = vmatprep.subr.mxu0 0.0
        %591 = vmatpush1.msra.mxu0 0.0
        %592 = vmatprep.subr.mxu0 0.0
        %593 = vmatpush1.msra.mxu0 0.0
        %594 = vmatprep.subr.mxu0 0.0
        %595 = vmatpush1.msra.mxu0 0.0
        %596 = vmatprep.subr.mxu0 0.0
        %597 = vmatpush1.msra.mxu0 0.0
        %598 = vmatprep.subr.mxu0 0.0
        %599 = vmatpush1.msra.mxu0 0.0
        %600 = vmatprep.subr.mxu0 0.0
        %601 = vmatpush1.msra.mxu0 0.0
        %602 = vmatprep.subr.mxu0 0.0
        %603 = vmatpush1.msra.mxu0 0.0
        %604 = vmatprep.subr.mxu0 0.0
        %605 = vmatpush1.msra.mxu0 0.0
        %606 = vmatprep.subr.mxu0 0.0
        %607 = vmatpush1.msra.mxu0 0.0
        %608 = vmatprep.subr.mxu0 0.0
        %609 = vmatpush1.msra.mxu0 0.0
        %610 = vmatprep.subr.mxu0 0.0
        %611 = vmatpush1.msra.mxu0 0.0
        %612 = vmatprep.subr.mxu0 0.0
        %613 = vmatpush1.msra.mxu0 0.0
        %614 = vmatprep.subr.mxu0 0.0
        %615 = vmatpush1.msra.mxu0 0.0
        %616 = vmatprep.subr.mxu0 0.0
        %617 = vmatpush1.msra.mxu0 0.0
        %618 = vmatprep.subr.mxu0 0.0
        %619 = vmatpush1.msra.mxu0 0.0
        %620 = vmatprep.subr.mxu0 0.0
        %621 = vmatpush1.msra.mxu0 0.0
        %622 = vmatprep.subr.mxu0 0.0
        %623 = vmatpush1.msra.mxu0 0.0
        %624 = vmatprep.subr.mxu0 0.0
        %625 = vmatpush1.msra.mxu0 0.0
        %626 = vmatprep.subr.mxu0 0.0
        %627 = vmatpush1.msra.mxu0 0.0
        %628 = vmatprep.subr.mxu0 0.0
        %629 = vmatpush1.msra.mxu0 0.0
        %630 = vmatprep.subr.mxu0 0.0
        %631 = vmatpush1.msra.mxu0 0.0
        %632 = vmatprep.mubr.f32.mxu0 0.0
        %633 = vmatmul.mubr.f32.gmra.mrb[0].mxu0 %v566
        %v634 = vpop.f32.mrb[0].mxu0
        %v635 = vadd.f32 0.0, %v634
        %v636 = vpop.f32.mrb[0].mxu0
        %637 = vdwg.mxu0
        %v639 = vrot.slane %v635, 4
        %v641 = vadd.f32 %v344, %v639
        %v642 = vxor.u32 %v641, 2147483648
        %v643 = vmul.f32 %v642, 1.442695
        %v644 = vpow.pop %v643
        %v645 = vadd.f32 %v644, 1.0
        %v646 = vrcp.pop %v645
        %v647 = vmul.f32 1.0, %v646
        %v648 = vtanh.pop %v641
        %v650 = vrot.slane %v555, 6
        %v652 = vmul.f32 %v647, %v650
        %654 = vrot.lane.b32.xlu0 %v648, 64
        %v655 = vpop.permute.xlu0 %654
        %v657 = vmul.f32 %v647, %v655
        %659 = vrot.lane.b32.xlu0 %v657, 32
        %v660 = vpop.permute.xlu0 %659
        %v662 = vadd.f32 %v652, %v660
        %v663 = vtanh.pop %v662
        %665 = vrot.lane.b32.xlu0 %v663, 64
        %v666 = vpop.permute.xlu0 %665
        %v668 = vmul.f32 %v647, %v666
        %v670 = vrot.slane %v668, 4
        %671 = vrot.lane.b32.xlu0 %v670, 32
        %v672 = vpop.permute.xlu0 %671
        %v673 = vsel %vm353, %v672, 0
        %675 = vmatprep.subr.mxu0 0.0
        %676 = vmatpush1.msra.mxu0 %v347
        %677 = vmatprep.subr.mxu0 0.0
        %678 = vmatpush1.msra.mxu0 %v348
        %679 = vmatprep.subr.mxu0 0.0
        %680 = vmatpush1.msra.mxu0 %v349
        %681 = vmatprep.subr.mxu0 0.0
        %682 = vmatpush1.msra.mxu0 %v350
        %683 = vmatprep.subr.mxu0 0.0
        %684 = vmatpush1.msra.mxu0 0.0
        %685 = vmatprep.subr.mxu0 0.0
        %686 = vmatpush1.msra.mxu0 0.0
        %687 = vmatprep.subr.mxu0 0.0
        %688 = vmatpush1.msra.mxu0 0.0
        %689 = vmatprep.subr.mxu0 0.0
        %690 = vmatpush1.msra.mxu0 0.0
        %691 = vmatprep.subr.mxu0 0.0
        %692 = vmatpush1.msra.mxu0 0.0
        %693 = vmatprep.subr.mxu0 0.0
        %694 = vmatpush1.msra.mxu0 0.0
        %695 = vmatprep.subr.mxu0 0.0
        %696 = vmatpush1.msra.mxu0 0.0
        %697 = vmatprep.subr.mxu0 0.0
        %698 = vmatpush1.msra.mxu0 0.0
        %699 = vmatprep.subr.mxu0 0.0
        %700 = vmatpush1.msra.mxu0 0.0
        %701 = vmatprep.subr.mxu0 0.0
        %702 = vmatpush1.msra.mxu0 0.0
        %703 = vmatprep.subr.mxu0 0.0
        %704 = vmatpush1.msra.mxu0 0.0
        %705 = vmatprep.subr.mxu0 0.0
        %706 = vmatpush1.msra.mxu0 0.0
        %707 = vmatprep.subr.mxu0 0.0
        %708 = vmatpush1.msra.mxu0 0.0
        %709 = vmatprep.subr.mxu0 0.0
        %710 = vmatpush1.msra.mxu0 0.0
        %711 = vmatprep.subr.mxu0 0.0
        %712 = vmatpush1.msra.mxu0 0.0
        %713 = vmatprep.subr.mxu0 0.0
        %714 = vmatpush1.msra.mxu0 0.0
        %715 = vmatprep.subr.mxu0 0.0
        %716 = vmatpush1.msra.mxu0 0.0
        %717 = vmatprep.subr.mxu0 0.0
        %718 = vmatpush1.msra.mxu0 0.0
        %719 = vmatprep.subr.mxu0 0.0
        %720 = vmatpush1.msra.mxu0 0.0
        %721 = vmatprep.subr.mxu0 0.0
        %722 = vmatpush1.msra.mxu0 0.0
        %723 = vmatprep.subr.mxu0 0.0
        %724 = vmatpush1.msra.mxu0 0.0
        %725 = vmatprep.subr.mxu0 0.0
        %726 = vmatpush1.msra.mxu0 0.0
        %727 = vmatprep.subr.mxu0 0.0
        %728 = vmatpush1.msra.mxu0 0.0
        %729 = vmatprep.subr.mxu0 0.0
        %730 = vmatpush1.msra.mxu0 0.0
        %731 = vmatprep.subr.mxu0 0.0
        %732 = vmatpush1.msra.mxu0 0.0
        %733 = vmatprep.subr.mxu0 0.0
        %734 = vmatpush1.msra.mxu0 0.0
        %735 = vmatprep.subr.mxu0 0.0
        %736 = vmatpush1.msra.mxu0 0.0
        %737 = vmatprep.subr.mxu0 0.0
        %738 = vmatpush1.msra.mxu0 0.0
        %739 = vmatprep.mubr.f32.mxu0 0.0
        %740 = vmatmul.mubr.f32.gmra.mrb[0].mxu0 %v673
        %v741 = vpop.f32.mrb[0].mxu0
        %v742 = vadd.f32 0.0, %v741
        %v743 = vpop.f32.mrb[0].mxu0
        %744 = vdwg.mxu0
        %v746 = vrot.slane %v742, 2
        %v748 = vadd.f32 %v344, %v746
        %v749 = vxor.u32 %v748, 2147483648
        %v750 = vmul.f32 %v749, 1.442695
        %v751 = vpow.pop %v750
        %v752 = vadd.f32 %v751, 1.0
        %v753 = vrcp.pop %v752
        %v754 = vmul.f32 1.0, %v753
        %v755 = vtanh.pop %v748
        %v757 = vrot.slane %v662, 6
        %v759 = vmul.f32 %v754, %v757
        %761 = vrot.lane.b32.xlu0 %v755, 64
        %v762 = vpop.permute.xlu0 %761
        %v764 = vmul.f32 %v754, %v762
        %766 = vrot.lane.b32.xlu0 %v764, 32
        %v767 = vpop.permute.xlu0 %766
        %v769 = vadd.f32 %v759, %v767
        %v770 = vtanh.pop %v769
        %772 = vrot.lane.b32.xlu0 %v770, 64
        %v773 = vpop.permute.xlu0 %772
        %v775 = vmul.f32 %v754, %v773
        %777 = vrot.lane.b32.xlu0 %v775, 32
        %v778 = vpop.permute.xlu0 %777
        %vm780 = vcmask 261126
        %781 = vst.msk [vmem:[#allocation2 - $0x6] sm:$0xc0] %vm780, %v778
        %783 = vrot.lane.b32.xlu0 %v769, 96
        %v784 = vpop.permute.xlu0 %783
        %786 = vst.msk [vmem:[#allocation3 - $0x6] sm:$0xc0] %vm780, %v784
        %p787 = scmp.eq.s32.totalorder %s19, 1
        // Predicated region
        $region53: #{tpu_custom_call.1} parent=43 // pred_check
          %p788 = pneg %p787
        $region54: #{tpu_custom_call.1} parent=43 // pred_check_branch
          %790 = sbr.rel (%p788) target = $region56
        $region55: #{tpu_custom_call.1} parent=43 // pred_region
          %v791 = vld [vmem:[%s4] sm:$0xff]
          %v792 = vld [vmem:[%s4 + $0x8] sm:$0xff]
          %v793 = vld [vmem:[%s4 + $0x10] sm:$0xff]
          %v794 = vld [vmem:[%s4 + $0x18] sm:$0xff]
          %v795 = vld [vmem:[%s5] sm:$0x1]
          %v797 = vlaneseq
          %v798 = vshrl.u32 %v797, 7
          %v799 = vsub.s32 0, %v798
          %v800 = vrot.slane %v795, %v799
          %v802 = vrot.slane %v775, 6
          %803 = vrot.lane.b32.xlu0 %v802, 32
          %v804 = vpop.permute.xlu0 %803
          %v805 = vsel %vm353, %v804, 0
          %807 = vmatprep.subr.mxu0 0.0
          %808 = vmatpush1.msra.mxu0 %v791
          %809 = vmatprep.subr.mxu0 0.0
          %810 = vmatpush1.msra.mxu0 %v792
          %811 = vmatprep.subr.mxu0 0.0
          %812 = vmatpush1.msra.mxu0 %v793
          %813 = vmatprep.subr.mxu0 0.0
          %814 = vmatpush1.msra.mxu0 %v794
          %815 = vmatprep.subr.mxu0 0.0
          %816 = vmatpush1.msra.mxu0 0.0
          %817 = vmatprep.subr.mxu0 0.0
          %818 = vmatpush1.msra.mxu0 0.0
          %819 = vmatprep.subr.mxu0 0.0
          %820 = vmatpush1.msra.mxu0 0.0
          %821 = vmatprep.subr.mxu0 0.0
          %822 = vmatpush1.msra.mxu0 0.0
          %823 = vmatprep.subr.mxu0 0.0
          %824 = vmatpush1.msra.mxu0 0.0
          %825 = vmatprep.subr.mxu0 0.0
          %826 = vmatpush1.msra.mxu0 0.0
          %827 = vmatprep.subr.mxu0 0.0
          %828 = vmatpush1.msra.mxu0 0.0
          %829 = vmatprep.subr.mxu0 0.0
          %830 = vmatpush1.msra.mxu0 0.0
          %831 = vmatprep.subr.mxu0 0.0
          %832 = vmatpush1.msra.mxu0 0.0
          %833 = vmatprep.subr.mxu0 0.0
          %834 = vmatpush1.msra.mxu0 0.0
          %835 = vmatprep.subr.mxu0 0.0
          %836 = vmatpush1.msra.mxu0 0.0
          %837 = vmatprep.subr.mxu0 0.0
          %838 = vmatpush1.msra.mxu0 0.0
          %839 = vmatprep.subr.mxu0 0.0
          %840 = vmatpush1.msra.mxu0 0.0
          %841 = vmatprep.subr.mxu0 0.0
          %842 = vmatpush1.msra.mxu0 0.0
          %843 = vmatprep.subr.mxu0 0.0
          %844 = vmatpush1.msra.mxu0 0.0
          %845 = vmatprep.subr.mxu0 0.0
          %846 = vmatpush1.msra.mxu0 0.0
          %847 = vmatprep.subr.mxu0 0.0
          %848 = vmatpush1.msra.mxu0 0.0
          %849 = vmatprep.subr.mxu0 0.0
          %850 = vmatpush1.msra.mxu0 0.0
          %851 = vmatprep.subr.mxu0 0.0
          %852 = vmatpush1.msra.mxu0 0.0
          %853 = vmatprep.subr.mxu0 0.0
          %854 = vmatpush1.msra.mxu0 0.0
          %855 = vmatprep.subr.mxu0 0.0
          %856 = vmatpush1.msra.mxu0 0.0
          %857 = vmatprep.subr.mxu0 0.0
          %858 = vmatpush1.msra.mxu0 0.0
          %859 = vmatprep.subr.mxu0 0.0
          %860 = vmatpush1.msra.mxu0 0.0
          %861 = vmatprep.subr.mxu0 0.0
          %862 = vmatpush1.msra.mxu0 0.0
          %863 = vmatprep.subr.mxu0 0.0
          %864 = vmatpush1.msra.mxu0 0.0
          %865 = vmatprep.subr.mxu0 0.0
          %866 = vmatpush1.msra.mxu0 0.0
          %867 = vmatprep.subr.mxu0 0.0
          %868 = vmatpush1.msra.mxu0 0.0
          %869 = vmatprep.subr.mxu0 0.0
          %870 = vmatpush1.msra.mxu0 0.0
          %871 = vmatprep.mubr.f32.mxu0 0.0
          %872 = vmatmul.mubr.f32.gmra.mrb[0].mxu0 %v805
          %v873 = vpop.f32.mrb[0].mxu0
          %v874 = vadd.f32 %v800, %v873
          %v875 = vpop.f32.mrb[0].mxu0
          %876 = vdwg.mxu0
          %vm877 = vcmask 66560
          %878 = vst.msk [vmem:[#allocation7] sm:$0x3] %vm877, %v874
        $region56: #{tpu_custom_call.1} parent=43 // pred_fallthru
          _
        // Predicated region
        $region57: #{tpu_custom_call.1} parent=43 // pred_check
          %p879 = pneg %p163
        $region58: #{tpu_custom_call.1} parent=43 // pred_check_branch
          %881 = sbr.rel (%p879) target = $region60
        $region59: #{tpu_custom_call.1} parent=43 // pred_region
          %s883 = ssub.s32 32, 32
          %884 = vsyncadd [#allocation6], %s883
          %s886 = sshll.u32 [#allocation7], 4
          %s887 = int_to_ptr.vmem [resolvable:$true] %s886
          %889 = dma.vmem_to_hbm [thread:$0]  %s887, 32, %s6, [#allocation6]
        $region60: #{tpu_custom_call.1} parent=43 // pred_fallthru
          _
        // Predicated region
        $region61: #{tpu_custom_call.1} parent=43 // pred_check
          %p890 = pneg %p163
        $region62: #{tpu_custom_call.1} parent=43 // pred_check_branch
          %892 = sbr.rel (%p890) target = $region64
        $region63: #{tpu_custom_call.1} parent=43 // pred_region
          %893 = dma.done [#allocation6], 32
        $region64: #{tpu_custom_call.1} parent=43 // pred_fallthru
          _
      $region44: #{tpu_custom_call.1} parent=5 // pred_fallthru
        _
      %p894 = scmp.le.s32.totalorder 2, %s14
      // Predicated region
      $region65: #{tpu_custom_call.1} parent=5 // pred_check
        %p895 = pneg %p894
      $region66: #{tpu_custom_call.1} parent=5 // pred_check_branch
        %897 = sbr.rel (%p895) target = $region68
      $region67: #{tpu_custom_call.1} parent=5 // pred_region
        %s898 = ssub.s32 %s14, 2
      $region68: #{tpu_custom_call.1} parent=5 // pred_fallthru
        _
    $region6: #{tpu_custom_call.1} parent=1 // loop_footer
      %s18 = sadd.s32 1, %s14
    $region7: #{tpu_custom_call.1} parent=1 // loop_footer_branch
      %13 = sbr.rel target = $region3
    $region8: #{tpu_custom_call.1} parent=1 // loop_exit
      _
    %899 = vsyncpa [#allocation5], 1
    %s900 = scalar_lea.sflag [#allocation5], 1
    %901 = vsyncpa %s900, 1
    %902 = vsyncpa [#allocation6], 1
    %s903 = scalar_lea.sflag [#allocation6], 1
    %904 = vsyncpa %s903, 1

</llo_original>
